<compile_context>
chip_gen: v7x
topology: tpu7x:2x2x1
jax: 0.10.0
libtpu: 0.0.40
codegen_flags: <defaults>
</compile_context>

<pallas_src>
import functools

import numpy as np
import jax
import jax.numpy as jnp
from jax.experimental import pallas as pl
from jax.experimental.pallas import tpu as pltpu

DIM = 3        # (x, y, z); x is the optical axis
LANE = 128     # TPU lane width
OUT_ROWS = 3   # packed output rows: [cp_y, cp_z, t]


def _aperture_kernel(p_ref, v_ref, out_ref):
    """One grid step over a (DIM, block_r, 128) slab of rays.

    p_ref   : VMEM (DIM, block_r, 128) ray origins (SoA)
    v_ref   : VMEM (DIM, block_r, 128) ray directions (SoA)
    out_ref : VMEM (OUT_ROWS, block_r, 128) packed [cp_y, cp_z, t]
    """
    P = p_ref[...]
    V = v_ref[...]

    px = P[0:1]                       # (1, R, 128)
    vx = V[0:1]                       # (1, R, 128)

    # Collision distance with the plane x = 0.  Exact division keeps results
    # bit-stable vs. a float32 reference; the kernel is HBM-bound, so an EUP
    # reciprocal would not change wall clock.
    t = -px / vx                      # (1, R, 128)

    # Lateral collision coordinates only: cp_x = P_x + t*V_x == 0 analytically
    # on the plane x = 0, so it is not written (saves 4 B/ray of HBM writes).
    cp_lat = P[1:DIM] + t * V[1:DIM]  # (DIM-1, R, 128)

    out_ref[0:DIM - 1] = cp_lat
    out_ref[DIM - 1:DIM] = t


def _round_up(x, m):
    return (x + m - 1) // m * m


def _choose_block_r(nr, pref_rows):
    """Sublane rows per grid step.

    Multiple of 8 (f32 tile), default 1024 rows = 131072 rays/step:
    ~4.5 MiB traffic per step (per-step overhead amortized) and ~9 MiB
    double-buffered VMEM -> safe on v5e's 16 MiB default scoped VMEM as well
    as v6e/v7x.  No artificial cap, no "keep grid >= 2" heuristic for tiny N.
    """
    pref = max(8, (pref_rows // 8) * 8)
    return min(pref, _round_up(nr, 8))


@functools.partial(jax.jit, static_argnames=("block_rays",))
def aperture_collide(P, V, radius_sq, *, block_rays=131072):
    """Ray / circular-plane collision (hot path of Aperture.forward).

    Args:
      P: (DIM, N) float32 ray origins, SoA layout.
      V: (DIM, N) float32 unit ray directions, SoA layout.
      radius_sq: scalar, (diameter / 2) ** 2 (traced -> no recompile on sweep).
      block_rays: target rays per grid step (static).

    Returns:
      t:     (N,)      float32 collision distances
      cp:    (DIM, N)  float32 collision points (full frame, SoA; cp_x == 0)
      valid: (N,)      bool    circular-aperture mask
    """
    D, N = P.shape
    assert D == DIM

    P = jnp.asarray(P, jnp.float32)
    V = jnp.asarray(V, jnp.float32)

    # Pad only to a LANE multiple (copy happens only when N % 128 != 0).
    n_lane_pad = (-N) % LANE
    if n_lane_pad:
        P = jnp.pad(P, ((0, 0), (0, n_lane_pad)))
        # Pad V_x with 1.0 so padded lanes stay finite; sliced off below.
        V = jnp.pad(V, ((0, 0), (0, n_lane_pad)), constant_values=1.0)
    nr = (N + n_lane_pad) // LANE

    block_r = _choose_block_r(nr, block_rays // LANE)
    n_blocks = pl.cdiv(nr, block_r)   # partial tail block handled by Pallas

    P3 = P.reshape(DIM, nr, LANE)     # free reshape: row-major contiguous
    V3 = V.reshape(DIM, nr, LANE)

    out = pl.pallas_call(
        _aperture_kernel,
        out_shape=jax.ShapeDtypeStruct((OUT_ROWS, nr, LANE), jnp.float32),
        grid=(n_blocks,),
        in_specs=[
            pl.BlockSpec((DIM, block_r, LANE), lambda i: (0, i, 0)),
            pl.BlockSpec((DIM, block_r, LANE), lambda i: (0, i, 0)),
        ],
        out_specs=pl.BlockSpec((OUT_ROWS, block_r, LANE), lambda i: (0, i, 0)),
        # "parallel" is harmless on single-TC chips; CORE_PARALLEL could be
        # tried on v7x if descriptor issue (not HBM) becomes the limiter.
        compiler_params=pltpu.CompilerParams(
            dimension_semantics=("parallel",)),
    )(P3, V3)

    out = out.reshape(OUT_ROWS, nr * LANE)[:, :N]
    cp_y, cp_z, t = out[0], out[1], out[2]

    # Aperture membership, recomputed here from the stored f32 collision
    # points: bit-identical to an in-kernel check, fused by XLA with the
    # downstream compaction, and saves a whole output row of HBM writes.
    rsq = jnp.asarray(radius_sq, jnp.float32)
    valid = jnp.logical_and(cp_y * cp_y + cp_z * cp_z <= rsq, V[0, :N] != 0.0)

    cp = jnp.stack([jnp.zeros_like(cp_y), cp_y, cp_z])  # cp_x == 0 on plane x=0
    return t, cp, valid


@functools.partial(jax.jit, static_argnames=("block_rays",))
def aperture_forward(P, V, radius_sq, *, block_rays=131072):
    """Full Aperture.forward: collide + on-device compaction of valid rays.

    Boolean filtering has a data-dependent shape (no static-shape equivalent),
    so filtered rays come back as fixed-size padded (DIM, N) arrays plus a
    count; compaction stays on device (no host sync).
    """
    t, cp, valid = aperture_collide(P, V, radius_sq, block_rays=block_rays)
    D, N = cp.shape
    Vf = jnp.asarray(V, jnp.float32)

    vi = valid.astype(jnp.int32)
    count = jnp.sum(vi)
    dest = jnp.where(valid, jnp.cumsum(vi) - 1, N)    # invalid -> OOB -> dropped

    # Scatter in row-major (N, 2*DIM) layout so each scattered row is a
    # contiguous 24-byte chunk (faster than a column scatter on SoA arrays).
    payload = jnp.concatenate([cp.T, Vf.T], axis=1)                   # (N, 6)
    packed = jnp.zeros((N, 2 * DIM), jnp.float32).at[dest].set(
        payload, mode="drop")
    new_P = packed[:, :DIM].T
    new_V = packed[:, DIM:].T
    # TODO(synk): kinematic chain (new_chain) is symbolic transform
    # bookkeeping, not tensor compute - omitted.
    # TODO(synk): a fully in-Pallas stream compaction (per-block valid counts
    # + offset-prefetched second pass) would avoid this XLA scatter, but needs
    # cross-lane compaction the TPU has no cheap primitive for; left to XLA.
    return new_P, new_V, count, t, valid


if __name__ == "__main__":
    key = jax.random.PRNGKey(0)
    kP, kV = jax.random.split(key)

    N = 2048                      # small demo; default block covers it in 1 step
    diameter = 2.0
    radius_sq = (diameter / 2.0) ** 2

    # Ray bundles generated directly in SoA layout (DIM, N): origins a bit
    # behind the plane, lateral spread larger than the aperture so the mask
    # is non-trivial; directions are forward-propagating unit vectors.
    P = (jax.random.normal(kP, (DIM, N), dtype=jnp.float32)
         * jnp.array([[0.5], [1.5], [1.5]], jnp.float32)
         + jnp.array([[-2.0], [0.0], [0.0]], jnp.float32))
    Vraw = (jax.random.normal(kV, (DIM, N), dtype=jnp.float32)
            * jnp.array([[0.2], [0.3], [0.3]], jnp.float32)
            + jnp.array([[1.0], [0.0], [0.0]], jnp.float32))
    V = Vraw / jnp.linalg.norm(Vraw, axis=0, keepdims=True)

    new_P, new_V, count, t, valid = jax.block_until_ready(
        aperture_forward(P, V, jnp.float32(radius_sq)))
    t_k, cp_k, valid_k = jax.block_until_ready(
        aperture_collide(P, V, jnp.float32(radius_sq)))

    # ---- pure-JAX float32 reference ----
    t_ref = -P[0] / V[0]
    cp_ref = P + t_ref[None, :] * V
    r2_ref = cp_ref[1] ** 2 + cp_ref[2] ** 2
    valid_ref = r2_ref <= radius_sq

    np.testing.assert_allclose(np.asarray(t_k), np.asarray(t_ref),
                               rtol=1e-5, atol=1e-5)
    # Kernel returns the analytically exact cp_x == 0; reference keeps ~1-ulp
    # noise from P_x + t*V_x, covered by atol.
    np.testing.assert_allclose(np.asarray(cp_k), np.asarray(cp_ref),
                               rtol=1e-5, atol=1e-5)

    # Valid mask must match except possibly within float32 noise of the rim.
    boundary = np.abs(np.asarray(r2_ref) - radius_sq) <= 1e-5 * radius_sq
    mismatch = (np.asarray(valid_k) != np.asarray(valid_ref)) & ~boundary
    assert not mismatch.any(), "valid mask mismatch away from aperture boundary"

    # On-device compaction is consistent with the kernel's own mask.
    mask = np.asarray(valid)
    n_valid = int(count)
    assert n_valid == int(mask.sum())
    np.testing.assert_allclose(np.asarray(new_P)[:, :n_valid],
                               np.asarray(cp_k)[:, mask], rtol=1e-6, atol=1e-6)
    np.testing.assert_array_equal(np.asarray(new_V)[:, :n_valid],
                                  np.asarray(V)[:, mask])
    assert np.all(np.asarray(new_P)[:, n_valid:] == 0.0)

    # Second case: N not a multiple of 128 and a small block size, to exercise
    # the lane-remainder pad and the partial tail block of the pl.cdiv grid.
    N2 = 2400
    P2, V2 = P[:, :N2], V[:, :N2]
    t2, cp2, valid2 = jax.block_until_ready(
        aperture_collide(P2, V2, jnp.float32(radius_sq), block_rays=1024))
    t2_ref = -P2[0] / V2[0]
    cp2_ref = P2 + t2_ref[None, :] * V2
    np.testing.assert_allclose(np.asarray(t2), np.asarray(t2_ref),
                               rtol=1e-5, atol=1e-5)
    np.testing.assert_allclose(np.asarray(cp2), np.asarray(cp2_ref),
                               rtol=1e-5, atol=1e-5)
    r2b = cp2_ref[1] ** 2 + cp2_ref[2] ** 2
    boundary2 = np.abs(np.asarray(r2b) - radius_sq) <= 1e-5 * radius_sq
    mismatch2 = (np.asarray(valid2) != np.asarray(r2b <= radius_sq)) & ~boundary2
    assert not mismatch2.any()

    print("KERNEL_OK")
</pallas_src>

<mosaic_0001>
module attributes {stable_mosaic.version = 11 : i64} {
  func.func @_aperture_kernel(%arg0: i32, %arg1: memref<3x16x128xf32, #tpu.memory_space<vmem>>, %arg2: memref<3x16x128xf32, #tpu.memory_space<vmem>>, %arg3: memref<3x16x128xf32, #tpu.memory_space<vmem>>) attributes {dimension_semantics = [#tpu.dimension_semantics<parallel>], iteration_bounds = array<i64: 1>, scalar_prefetch = 0 : i64, scratch_operands = 0 : i64, tpu.core_type = #tpu.core_type<tc>, window_params = [{transform_indices = @transform_0, window_bounds = array<i64: 3, 16, 128>}, {transform_indices = @transform_1, window_bounds = array<i64: 3, 16, 128>}, {transform_indices = @transform_2, window_bounds = array<i64: 3, 16, 128>}]} {
    %c0 = arith.constant 0 : index
    %c0_0 = arith.constant 0 : index
    %c0_1 = arith.constant 0 : index
    %0 = vector.load %arg1[%c0, %c0_0, %c0_1] : memref<3x16x128xf32, #tpu.memory_space<vmem>>, vector<3x16x128xf32>
    %c0_2 = arith.constant 0 : index
    %c0_3 = arith.constant 0 : index
    %c0_4 = arith.constant 0 : index
    %1 = vector.load %arg2[%c0_2, %c0_3, %c0_4] : memref<3x16x128xf32, #tpu.memory_space<vmem>>, vector<3x16x128xf32>
    %2 = vector.extract_strided_slice %0 {offsets = [0, 0, 0], sizes = [1, 16, 128], strides = [1, 1, 1]} : vector<3x16x128xf32> to vector<1x16x128xf32>
    %3 = vector.extract_strided_slice %1 {offsets = [0, 0, 0], sizes = [1, 16, 128], strides = [1, 1, 1]} : vector<3x16x128xf32> to vector<1x16x128xf32>
    %cst = arith.constant 0.000000e+00 : f32
    %4 = vector.broadcast %cst : f32 to vector<1x16x128xf32>
    %5 = arith.subf %4, %2 : vector<1x16x128xf32>
    %6 = arith.divf %5, %3 : vector<1x16x128xf32>
    %7 = vector.extract_strided_slice %0 {offsets = [1, 0, 0], sizes = [2, 16, 128], strides = [1, 1, 1]} : vector<3x16x128xf32> to vector<2x16x128xf32>
    %8 = vector.extract_strided_slice %1 {offsets = [1, 0, 0], sizes = [2, 16, 128], strides = [1, 1, 1]} : vector<3x16x128xf32> to vector<2x16x128xf32>
    %9 = vector.broadcast %6 : vector<1x16x128xf32> to vector<2x16x128xf32>
    %10 = arith.mulf %9, %8 : vector<2x16x128xf32>
    %11 = arith.addf %7, %10 : vector<2x16x128xf32>
    %c0_5 = arith.constant 0 : index
    %c0_6 = arith.constant 0 : index
    %c0_7 = arith.constant 0 : index
    %12 = vector.load %arg3[%c0_5, %c0_6, %c0_7] : memref<3x16x128xf32, #tpu.memory_space<vmem>>, vector<2x16x128xf32>
    tpu.vector_store %arg3[%c0_5, %c0_6, %c0_7], %11 {strides = array<i32>} : memref<3x16x128xf32, #tpu.memory_space<vmem>>, vector<2x16x128xf32>,
    %c2 = arith.constant 2 : index
    %c0_8 = arith.constant 0 : index
    %c0_9 = arith.constant 0 : index
    %13 = vector.load %arg3[%c2, %c0_8, %c0_9] : memref<3x16x128xf32, #tpu.memory_space<vmem>>, vector<1x16x128xf32>
    tpu.vector_store %arg3[%c2, %c0_8, %c0_9], %6 {strides = array<i32>} : memref<3x16x128xf32, #tpu.memory_space<vmem>>, vector<1x16x128xf32>,
    return
  }
  func.func @transform_0(%arg0: i32) -> (i32, i32, i32) {
    %c0_i32 = arith.constant 0 : i32
    %c0_i32_0 = arith.constant 0 : i32
    %c0_i32_1 = arith.constant 0 : i32
    return %c0_i32, %arg0, %c0_i32_0 : i32, i32, i32
  }
  func.func @transform_1(%arg0: i32) -> (i32, i32, i32) {
    %c0_i32 = arith.constant 0 : i32
    %c0_i32_0 = arith.constant 0 : i32
    %c0_i32_1 = arith.constant 0 : i32
    return %c0_i32, %arg0, %c0_i32_0 : i32, i32, i32
  }
  func.func @transform_2(%arg0: i32) -> (i32, i32, i32) {
    %c0_i32 = arith.constant 0 : i32
    %c0_i32_0 = arith.constant 0 : i32
    %c0_i32_1 = arith.constant 0 : i32
    return %c0_i32, %arg0, %c0_i32_0 : i32, i32, i32
  }
}

</mosaic_0001>

<llo_original>
// kernel: aperture_collide.1
$region0: #{aperture_collide.1}
  #allocation0 [shape = 'u32[]', space=smem, size = 0x4, offset = 0x4, fixed_abs, tag = 'smem constant byte address 0x4 - core index']
  #allocation1 [shape = 'u32[144,128]{1,0:T(1,128)}', space=vmem, size = 0x12000, scoped, tag = 'internal scratch']
  %s0 = inlined_call_operand.vmem [shape: f32[3,16,128], index: 0, kind: input, shape index: {}]
  %s1 = inlined_call_operand.vmem [shape: f32[3,16,128], index: 1, kind: input, shape index: {}]
  %s2 = inlined_call_operand.vmem [shape: f32[3,16,128], index: 2, kind: output, shape index: {}]
  %s3 = sld [smem:[#allocation0]]
  $region18: #{aperture_collide.1} parent=0
    _
  %s5 = ssub.s32 1, %s3
  %s6 = scalar_select 0, %s5, %s3
  // Predicated region
  $region2: #{aperture_collide.1} parent=0 // pred_check
    _
  $region3: #{aperture_collide.1} parent=0 // pred_check_branch
    %8 = sbr.rel (0) target = $region5
  $region4: #{aperture_collide.1} parent=0 // pred_region
    _
  $region5: #{aperture_collide.1} parent=0 // pred_fallthru
    _
  // Predicated region
  $region6: #{aperture_collide.1} parent=0 // pred_check
    _
  $region7: #{aperture_collide.1} parent=0 // pred_check_branch
    %10 = sbr.rel (0) target = $region9
  $region8: #{aperture_collide.1} parent=0 // pred_region
    _
  $region9: #{aperture_collide.1} parent=0 // pred_fallthru
    _
  %v11 = vld [vmem:[%s0] sm:$0xff]
  %v12 = vld [vmem:[%s0 + $0x8] sm:$0xff]
  %v13 = vld [vmem:[%s0 + $0x10] sm:$0xff]
  %v14 = vld [vmem:[%s0 + $0x18] sm:$0xff]
  %v15 = vld [vmem:[%s0 + $0x20] sm:$0xff]
  %v16 = vld [vmem:[%s0 + $0x28] sm:$0xff]
  %v17 = vld [vmem:[%s1] sm:$0xff]
  %v18 = vld [vmem:[%s1 + $0x8] sm:$0xff]
  %v19 = vld [vmem:[%s1 + $0x10] sm:$0xff]
  %v20 = vld [vmem:[%s1 + $0x18] sm:$0xff]
  %v21 = vld [vmem:[%s1 + $0x20] sm:$0xff]
  %v22 = vld [vmem:[%s1 + $0x28] sm:$0xff]
  %v23 = vsub.f32 0.0, %v11
  %v24 = vsub.f32 0.0, %v12
  %v25 = vrcp.pop %v17
  %v26 = vmul.f32 %v23, %v25
  %v27 = vrcp.pop %v18
  %v28 = vmul.f32 %v24, %v27
  %v29 = vmul.f32 %v26, %v19
  %v30 = vmul.f32 %v28, %v20
  %v31 = vmul.f32 %v26, %v21
  %v32 = vmul.f32 %v28, %v22
  %v33 = vadd.f32 %v13, %v29
  %v34 = vadd.f32 %v14, %v30
  %v35 = vadd.f32 %v15, %v31
  %v36 = vadd.f32 %v16, %v32
  %37 = vst [vmem:[%s2] sm:$0xff] %v33
  %38 = vst [vmem:[%s2 + $0x8] sm:$0xff] %v34
  %39 = vst [vmem:[%s2 + $0x10] sm:$0xff] %v35
  %40 = vst [vmem:[%s2 + $0x18] sm:$0xff] %v36
  %s41 = scalar_lea.vmem %s2, 32
  %42 = vst [vmem:[%s41] sm:$0xff] %v26
  %43 = vst [vmem:[%s41 + $0x8] sm:$0xff] %v28
  // Predicated region
  $region10: #{aperture_collide.1} parent=0 // pred_check
    _
  $region11: #{aperture_collide.1} parent=0 // pred_check_branch
    %45 = sbr.rel (0) target = $region13
  $region12: #{aperture_collide.1} parent=0 // pred_region
    _
  $region13: #{aperture_collide.1} parent=0 // pred_fallthru
    _
  // Predicated region
  $region14: #{aperture_collide.1} parent=0 // pred_check
    _
  $region15: #{aperture_collide.1} parent=0 // pred_check_branch
    %47 = sbr.rel (0) target = $region17
  $region16: #{aperture_collide.1} parent=0 // pred_region
    _
  $region17: #{aperture_collide.1} parent=0 // pred_fallthru
    _

</llo_original>
